<compile_context>
chip_gen: v6e
topology: v6e:2x2x1
jax: 0.10.0
libtpu: 0.0.40
codegen_flags: <defaults>
</compile_context>

<pallas_src>
import jax
import jax.numpy as jnp
from jax import lax
from jax.experimental import pallas as pl
from jax.experimental.pallas import tpu as pltpu


def _embed_kernel(ids_ref, pix_ref, pos_ref, o_ref):
    """One grid step: embed a TQ-token chunk of one batch row.

    ids_ref: (TQ, 1)  int32 token ids (leading grid dim squeezed away)
    pix_ref: (V, Dp)  VMEM-resident pixel-embedding table
    pos_ref: (TQ, Dp) positional-embedding slab for this sequence chunk
    o_ref:   (TQ, Dp) lane-dense output slab
    """
    tq, _ = o_ref.shape
    v = pix_ref.shape[0]

    ids = ids_ref[...]                                            # (TQ, 1) int32
    # One-hot gather on the MXU: onehot(TQ, V) @ table(V, Dp).
    onehot = (ids == lax.broadcasted_iota(jnp.int32, (tq, v), 1)
              ).astype(pix_ref.dtype)
    pix = jnp.dot(onehot, pix_ref[...],
                  preferred_element_type=jnp.float32,
                  precision=lax.Precision.HIGHEST)                # exact row select
    o_ref[...] = (pix + pos_ref[...].astype(jnp.float32)).astype(o_ref.dtype)


def _pick_chunk(seq_len, cap=512):
    """Largest divisor of seq_len <= cap, preferring multiples of 8 (sublane tile)."""
    divs = [t for t in range(1, min(seq_len, cap) + 1) if seq_len % t == 0]
    mult8 = [t for t in divs if t % 8 == 0]
    return max(mult8) if mult8 else max(divs)


def embeddings_forward(x_ids, pix_table, pos_table, *, chunk=None):
    """x_ids: (B, S) int token ids; pix_table: (V, D); pos_table: (P, D), P >= S."""
    B, S = x_ids.shape
    V, D = pix_table.shape
    P, D2 = pos_table.shape
    assert D2 == D, "pix/pos hidden sizes differ"
    assert P >= S, "position table has fewer rows than seq_length"

    out_dtype = jnp.result_type(pix_table.dtype, pos_table.dtype)

    TQ = chunk if chunk is not None else _pick_chunk(S)
    assert S % TQ == 0
    n_chunks = S // TQ
    N = B * S

    # Pad hidden dim to a multiple of 128 so every output store is unmasked/lane-dense.
    Dp = ((D + 127) // 128) * 128
    if Dp != D:
        pad = ((0, 0), (0, Dp - D))
        pix_p = jnp.pad(pix_table, pad)
        pos_p = jnp.pad(pos_table, pad)
    else:
        pix_p, pos_p = pix_table, pos_table

    # (B, S) -> (B * n_chunks, TQ, 1); flat chunk index = b * n_chunks + s.
    ids = x_ids.astype(jnp.int32).reshape(B * n_chunks, TQ, 1)

    grid = (n_chunks, B)  # batch innermost -> pos slab reused across the batch

    grid_spec = pltpu.PrefetchScalarGridSpec(
        num_scalar_prefetch=0,
        grid=grid,
        in_specs=[
            # token ids for this (chunk, batch) tile
            pl.BlockSpec((pl.Squeezed(), TQ, 1),
                         lambda s, b: (b * n_chunks + s, 0, 0)),
            # full pixel-embedding table, VMEM-resident (constant block index)
            pl.BlockSpec((V, Dp), lambda s, b: (0, 0)),
            # positional slab for sequence chunk s (reused over inner batch axis)
            pl.BlockSpec((TQ, Dp), lambda s, b: (s, 0)),
        ],
        out_specs=pl.BlockSpec((TQ, Dp), lambda s, b: (b * n_chunks + s, 0)),
    )

    itemsize = jnp.dtype(out_dtype).itemsize
    bytes_accessed = (ids.size * 4
                      + pix_p.size * pix_p.dtype.itemsize
                      + pos_p.size * pos_p.dtype.itemsize
                      + N * Dp * itemsize)
    cost = pl.CostEstimate(flops=2 * N * V * Dp, transcendentals=0,
                           bytes_accessed=bytes_accessed)

    out = pl.pallas_call(
        _embed_kernel,
        out_shape=jax.ShapeDtypeStruct((N, Dp), out_dtype),
        grid_spec=grid_spec,
        compiler_params=pltpu.CompilerParams(
            dimension_semantics=("parallel", "parallel"),
            vmem_limit_bytes=32 * 1024 * 1024),
        cost_estimate=cost,
    )(ids, pix_p, pos_p)

    out = out.reshape(B, S, Dp)
    if Dp != D:
        out = out[..., :D]
    return out


# ---------------- pure-JAX reference mimicking the PyTorch forward ----------------
def torch_like_ref(x_ids, pix_table, pos_table):
    B, S = x_ids.shape
    position_ids = jnp.arange(S)
    pix = pix_table[x_ids]            # (B, S, D)
    pos = pos_table[position_ids]     # (S, D)
    return pix + pos[None, :, :]


if __name__ == "__main__":
    # Small config consistent with the module:
    #   n_clusters (vocab) = 16, n_pixels = 4 -> 16 positions, hidden = 32,
    #   batch = 2, seq = 8 (embed_pdrop irrelevant: dropout is identity in eval).
    B, S, V, P, D = 2, 8, 16, 16, 32
    key = jax.random.PRNGKey(0)
    k_ids, k_pix, k_pos = jax.random.split(key, 3)
    x_ids = jax.random.randint(k_ids, (B, S), 0, V, dtype=jnp.int32)
    pix_table = jax.random.normal(k_pix, (V, D), jnp.float32) * 0.02
    pos_table = jax.random.normal(k_pos, (P, D), jnp.float32) * 0.02

    out = jax.block_until_ready(embeddings_forward(x_ids, pix_table, pos_table))
    ref = torch_like_ref(x_ids, pix_table, pos_table)

    assert out.shape == (B, S, D)
    err = float(jnp.max(jnp.abs(out - ref)))
    # HIGHEST-precision one-hot matmul is exact for f32 tables (err ~ 0); 5e-4
    # comfortably separates rounding from structural bugs (wrong row >= ~1e-2).
    assert err < 5e-4, err
    print("KERNEL_OK")
</pallas_src>

<mosaic_0001>
module attributes {stable_mosaic.version = 11 : i64} {
  func.func @_embed_kernel(%arg0: i32, %arg1: i32, %arg2: memref<1x8x1xi32, #tpu.memory_space<vmem>>, %arg3: memref<16x128xf32, #tpu.memory_space<vmem>>, %arg4: memref<8x128xf32, #tpu.memory_space<vmem>>, %arg5: memref<8x128xf32, #tpu.memory_space<vmem>>) attributes {dimension_semantics = [#tpu.dimension_semantics<parallel>, #tpu.dimension_semantics<parallel>], iteration_bounds = array<i64: 1, 2>, scalar_prefetch = 0 : i64, scratch_operands = 0 : i64, tpu.core_type = #tpu.core_type<tc>, window_params = [{transform_indices = @transform_0, window_bounds = array<i64: 1, 8, 1>}, {pipeline_mode = #tpu.pipeline_mode<synchronous>, transform_indices = @transform_1, window_bounds = array<i64: 16, 128>}, {transform_indices = @transform_2, window_bounds = array<i64: 8, 128>}, {transform_indices = @transform_3, window_bounds = array<i64: 8, 128>}]} {
    %c0 = arith.constant 0 : index
    %c0_0 = arith.constant 0 : index
    %c0_1 = arith.constant 0 : index
    %0 = vector.load %arg2[%c0, %c0_0, %c0_1] : memref<1x8x1xi32, #tpu.memory_space<vmem>>, vector<1x8x1xi32>
    %1 = vector.shape_cast %0 : vector<1x8x1xi32> to vector<8x1xi32>
    %2 = tpu.iota {dimensions = array<i32: 1>} : vector<8x16xi32>
    %3 = vector.broadcast %1 : vector<8x1xi32> to vector<8x16xi32>
    %4 = arith.cmpi eq, %3, %2 : vector<8x16xi32>
    %5 = arith.extui %4 : vector<8x16xi1> to vector<8x16xi32>
    %6 = arith.sitofp %5 : vector<8x16xi32> to vector<8x16xf32>
    %c0_2 = arith.constant 0 : index
    %c0_3 = arith.constant 0 : index
    %7 = vector.load %arg3[%c0_2, %c0_3] : memref<16x128xf32, #tpu.memory_space<vmem>>, vector<16x128xf32>
    %cst = arith.constant dense<0.000000e+00> : vector<8x128xf32>
    %8 = tpu.matmul %6, %7, %cst {dimension_numbers = #tpu.dot_dimension_numbers<[1], [0], [0], [1], [0, 0, 1, 1], [], []>, precision = #tpu.contract_precision<fp32>} : vector<8x16xf32>, vector<16x128xf32>, vector<8x128xf32> -> vector<8x128xf32>
    %c0_4 = arith.constant 0 : index
    %c0_5 = arith.constant 0 : index
    %9 = vector.load %arg4[%c0_4, %c0_5] : memref<8x128xf32, #tpu.memory_space<vmem>>, vector<8x128xf32>
    %10 = arith.addf %8, %9 : vector<8x128xf32>
    %c0_6 = arith.constant 0 : index
    %c0_7 = arith.constant 0 : index
    %11 = vector.load %arg5[%c0_6, %c0_7] : memref<8x128xf32, #tpu.memory_space<vmem>>, vector<8x128xf32>
    tpu.vector_store %arg5[%c0_6, %c0_7], %10 {strides = array<i32>} : memref<8x128xf32, #tpu.memory_space<vmem>>, vector<8x128xf32>,
    return
  }
  func.func @transform_0(%arg0: i32, %arg1: i32) -> (i32, i32, i32) {
    %c1_i32 = arith.constant 1 : i32
    %0 = arith.muli %arg1, %c1_i32 : i32
    %1 = arith.addi %0, %arg0 : i32
    %c0_i32 = arith.constant 0 : i32
    %c0_i32_0 = arith.constant 0 : i32
    %c0_i32_1 = arith.constant 0 : i32
    return %1, %c0_i32, %c0_i32_0 : i32, i32, i32
  }
  func.func @transform_1(%arg0: i32, %arg1: i32) -> (i32, i32) {
    %c0_i32 = arith.constant 0 : i32
    %c0_i32_0 = arith.constant 0 : i32
    %c0_i32_1 = arith.constant 0 : i32
    return %c0_i32, %c0_i32_0 : i32, i32
  }
  func.func @transform_2(%arg0: i32, %arg1: i32) -> (i32, i32) {
    %c0_i32 = arith.constant 0 : i32
    %c0_i32_0 = arith.constant 0 : i32
    return %arg0, %c0_i32 : i32, i32
  }
  func.func @transform_3(%arg0: i32, %arg1: i32) -> (i32, i32) {
    %c1_i32 = arith.constant 1 : i32
    %0 = arith.muli %arg1, %c1_i32 : i32
    %1 = arith.addi %0, %arg0 : i32
    %c0_i32 = arith.constant 0 : i32
    %c0_i32_0 = arith.constant 0 : i32
    return %1, %c0_i32 : i32, i32
  }
}

</mosaic_0001>

<llo_original>
// kernel: tpu_custom_call.1
$region0: #{tpu_custom_call.1}
  #allocation0 [shape = 'u32[]', space=smem, size = 0x4, offset = 0x4, fixed_abs, tag = 'smem constant byte address 0x4 - core index']
  #allocation1 [shape = 'u32[144,128]{1,0:T(1,128)}', space=vmem, size = 0x12000, scoped, tag = 'internal scratch']
  %s0 = inlined_call_operand.vmem [shape: s32[2,8,1], index: 0, kind: input, shape index: {}]
  %s1 = inlined_call_operand.vmem [shape: f32[16,128], index: 1, kind: input, shape index: {}]
  %s2 = inlined_call_operand.hbm [shape: f32[16,128], index: 2, kind: input, shape index: {}]
  %s3 = inlined_call_operand.hbm [shape: f32[16,128], index: 3, kind: output, shape index: {}]
  %s4 = sld [smem:[#allocation0]]
  $region49: #{tpu_custom_call.1} parent=0
    _
  %s6 = ssub.s32 1, %s4
  %s7 = scalar_select 0, %s6, %s4
  $region1: #{tpu_custom_call.1} parent=0
    #allocation2 [shape = 'u8[4096]{0}', space=vmem, size = 0x1000, scoped, tag = 'input window, operand 2, single buffered']
    #allocation3 [shape = 's32[2]{0}', space=sflag, size = 0x8, scoped, tag = 'scoped memory for tpu_custom_call.1']
    #allocation4 [shape = 's32[2]{0}', space=sflag, size = 0x8, scoped, tag = 'scoped memory for tpu_custom_call.1']
    #allocation5 [shape = 'u8[8192]{0}', space=vmem, size = 0x2000, scoped, tag = 'output window, operand 0']
    %8 = vsyncpa [#allocation3], 0
    %9 = vsyncpa [#allocation4], 0
    %s10 = scalar_lea.sflag [#allocation4], 1
    %11 = vsyncpa %s10, 0
    loop: start=0, step=1, limit=4
    $region2: #{tpu_custom_call.1} parent=1 // loop_pre_header
      _
    $region3: #{tpu_custom_call.1} parent=1 // loop_header
      %s13 = sphi 0, %s17
      %p14 = scmp.ge.s32.totalorder %s13, 4
      %s20 = sphi 0, %s32
      %s21 = sphi 0, %s28
      %s22 = sphi 0, %s20
      %s23 = sphi 0, %s21
      %s24 = sphi 0, %s22
      %s25 = sphi 0, %s23
      %s37 = sphi 0, %s39
      %s40 = sphi 0, %s37
      %s41 = sphi 0, %s40
      %s57 = sphi 0, %s41
      %s61 = sphi 0, %s61
      %s63 = sphi 0, %s61
      %s64 = sphi 0, %s63
      %s78 = sphi 0, %s64
      %s84 = sphi 0, %s86
      %s87 = sphi 0, %s84
      %s88 = sphi 0, %s87
      %s104 = sphi 0, %s88
      %s112 = sphi 0, %s114
      %s115 = sphi 0, %s112
      %s116 = sphi 0, %s115
      %s132 = sphi 0, %s116
    $region4: #{tpu_custom_call.1} parent=1 // loop_header_branch
      %16 = sbr.rel (%p14) target = $region8
    $region5: #{tpu_custom_call.1} parent=1 // loop_body
      %s18 = ssub.s32 %s13, 1
      %s19 = ssub.s32 %s13, 2
      %s26 = sadd.s32 1, %s21
      %p27 = scmp.ge.s32.totalorder %s26, 2
      %s28 = scalar_select %p27, 0, %s26
      %s29 = sadd.s32 1, %s20
      %s30 = scalar_select %p27, %s29, %s20
      %p31 = scmp.ge.s32.totalorder %s30, 1
      %s32 = scalar_select %p31, 0, %s30
      %s33 = sadd.s32 %s21, %s20
      %s34 = sadd.s32 %s28, %s32
      %s35 = ssub.s32 %s33, %s34
      %p36 = scmp.eq.s32.totalorder %s35, 0
      %s38 = sadd.s32 %s37, 1
      %s39 = scalar_select %p36, %s37, %s38
      %p42 = pneg %p36
      %p43 = scmp.eq.s32.totalorder %s13, 1
      %p44 = por %p42, %p43
      %p45 = scmp.ne.s32.totalorder %s37, %s40
      %p46 = scmp.eq.s32.totalorder %s13, 0
      %p47 = por %p45, %p46
      %p48 = scmp.ne.s32.totalorder %s37, %s40
      %p49 = scmp.eq.s32.totalorder %s18, 1
      %p50 = por %p48, %p49
      %p51 = scmp.ne.s32.totalorder %s40, %s41
      %p52 = scmp.eq.s32.totalorder %s18, 0
      %p53 = por %p51, %p52
      %p54 = scmp.ne.s32.totalorder %s40, %s41
      %p55 = scmp.eq.s32.totalorder %s19, 1
      %p56 = por %p54, %p55
      %p58 = scmp.ne.s32.totalorder %s41, %s57
      %p59 = scmp.eq.s32.totalorder %s19, 0
      %p60 = por %p58, %p59
      %s62 = sadd.s32 %s61, 1
      %p65 = scmp.eq.s32.totalorder %s13, 1
      %p66 = scmp.ne.s32.totalorder %s61, %s63
      %p67 = scmp.eq.s32.totalorder %s13, 0
      %p68 = por %p66, %p67
      %p69 = scmp.ne.s32.totalorder %s61, %s63
      %p70 = scmp.eq.s32.totalorder %s18, 1
      %p71 = por %p69, %p70
      %p72 = scmp.ne.s32.totalorder %s63, %s64
      %p73 = scmp.eq.s32.totalorder %s18, 0
      %p74 = por %p72, %p73
      %p75 = scmp.ne.s32.totalorder %s63, %s64
      %p76 = scmp.eq.s32.totalorder %s19, 1
      %p77 = por %p75, %p76
      %p79 = scmp.ne.s32.totalorder %s64, %s78
      %p80 = scmp.eq.s32.totalorder %s19, 0
      %p81 = por %p79, %p80
      %s82 = ssub.s32 %s20, %s32
      %p83 = scmp.eq.s32.totalorder %s82, 0
      %s85 = sadd.s32 %s84, 1
      %s86 = scalar_select %p83, %s84, %s85
      %p89 = pneg %p83
      %p90 = scmp.eq.s32.totalorder %s13, 1
      %p91 = por %p89, %p90
      %p92 = scmp.ne.s32.totalorder %s84, %s87
      %p93 = scmp.eq.s32.totalorder %s13, 0
      %p94 = por %p92, %p93
      %p95 = scmp.ne.s32.totalorder %s84, %s87
      %p96 = scmp.eq.s32.totalorder %s18, 1
      %p97 = por %p95, %p96
      %p98 = scmp.ne.s32.totalorder %s87, %s88
      %p99 = scmp.eq.s32.totalorder %s18, 0
      %p100 = por %p98, %p99
      %p101 = scmp.ne.s32.totalorder %s87, %s88
      %p102 = scmp.eq.s32.totalorder %s19, 1
      %p103 = por %p101, %p102
      %p105 = scmp.ne.s32.totalorder %s88, %s104
      %p106 = scmp.eq.s32.totalorder %s19, 0
      %p107 = por %p105, %p106
      %s108 = sadd.s32 %s21, %s20
      %s109 = sadd.s32 %s28, %s32
      %s110 = ssub.s32 %s108, %s109
      %p111 = scmp.eq.s32.totalorder %s110, 0
      %s113 = sadd.s32 %s112, 1
      %s114 = scalar_select %p111, %s112, %s113
      %p117 = pneg %p111
      %p118 = scmp.eq.s32.totalorder %s13, 1
      %p119 = por %p117, %p118
      %p120 = scmp.ne.s32.totalorder %s112, %s115
      %p121 = scmp.eq.s32.totalorder %s13, 0
      %p122 = por %p120, %p121
      %p123 = scmp.ne.s32.totalorder %s112, %s115
      %p124 = scmp.eq.s32.totalorder %s18, 1
      %p125 = por %p123, %p124
      %p126 = scmp.ne.s32.totalorder %s115, %s116
      %p127 = scmp.eq.s32.totalorder %s18, 0
      %p128 = por %p126, %p127
      %p129 = scmp.ne.s32.totalorder %s115, %s116
      %p130 = scmp.eq.s32.totalorder %s19, 1
      %p131 = por %p129, %p130
      %p133 = scmp.ne.s32.totalorder %s116, %s132
      %p134 = scmp.eq.s32.totalorder %s19, 0
      %p135 = por %p133, %p134
      %p136 = scmp.le.s32.totalorder 1, %s13
      %p137 = scmp.lt.s32.totalorder %s13, 3
      %p138 = pnand %p136, %p137
      %p139 = pneg %p138
      // Predicated region
      $region9: #{tpu_custom_call.1} parent=5 // pred_check
        _
      $region10: #{tpu_custom_call.1} parent=5 // pred_check_branch
        %141 = sbr.rel (%p138) target = $region12
      $region11: #{tpu_custom_call.1} parent=5 // pred_region
        %s142 = ssub.s32 %s13, 1
        // Predicated region
        $region13: #{tpu_custom_call.1} parent=11 // pred_check
          %p143 = pneg %p74
        $region14: #{tpu_custom_call.1} parent=11 // pred_check_branch
          %145 = sbr.rel (%p143) target = $region16
        $region15: #{tpu_custom_call.1} parent=11 // pred_region
          _
        $region16: #{tpu_custom_call.1} parent=11 // pred_fallthru
          _
        // Predicated region
        $region17: #{tpu_custom_call.1} parent=11 // pred_check
          %p146 = pneg %p100
        $region18: #{tpu_custom_call.1} parent=11 // pred_check_branch
          %148 = sbr.rel (%p146) target = $region20
        $region19: #{tpu_custom_call.1} parent=11 // pred_region
          %s150 = ssub.s32 128, 128
          %151 = vsyncadd [#allocation3], %s150
          %s152 = smul.addr %s22, 128
          %s153 = scalar_lea.hbm %s2, %s152
          %s155 = sshll.u32 [#allocation2], 4
          %s156 = int_to_ptr.vmem [resolvable:$true] %s155
          %158 = dma.hbm_to_vmem [thread:$0]  %s153, 128, %s156, [#allocation3]
        $region20: #{tpu_custom_call.1} parent=11 // pred_fallthru
          _
      $region12: #{tpu_custom_call.1} parent=5 // pred_fallthru
        _
      %p159 = scmp.lt.s32.totalorder %s13, 2
      // Predicated region
      $region21: #{tpu_custom_call.1} parent=5 // pred_check
        %p160 = pneg %p159
      $region22: #{tpu_custom_call.1} parent=5 // pred_check_branch
        %162 = sbr.rel (%p160) target = $region24
      $region23: #{tpu_custom_call.1} parent=5 // pred_region
        // Predicated region
        $region25: #{tpu_custom_call.1} parent=23 // pred_check
          %p163 = pneg %p47
        $region26: #{tpu_custom_call.1} parent=23 // pred_check_branch
          %165 = sbr.rel (%p163) target = $region28
        $region27: #{tpu_custom_call.1} parent=23 // pred_region
          %s166 = sadd.s32 %s21, %s20
          %p167 = scmp.lt.s32.totalorder %s166, 1
          %s168 = scalar_select %p167, %s166, 1
          %s169 = smul.addr %s168, 8
          %s170 = scalar_lea.vmem %s0, %s169
          %s171 = sadd.s32 %s21, %s20
        $region28: #{tpu_custom_call.1} parent=23 // pred_fallthru
          _
      $region24: #{tpu_custom_call.1} parent=5 // pred_fallthru
        _
      %p172 = scmp.le.s32.totalorder 1, %s13
      %p173 = scmp.lt.s32.totalorder %s13, 3
      %p174 = pnand %p172, %p173
      %p175 = pneg %p174
      // Predicated region
      $region29: #{tpu_custom_call.1} parent=5 // pred_check
        _
      $region30: #{tpu_custom_call.1} parent=5 // pred_check_branch
        %177 = sbr.rel (%p174) target = $region32
      $region31: #{tpu_custom_call.1} parent=5 // pred_region
        %s178 = ssub.s32 %s13, 1
        // Predicated region
        $region33: #{tpu_custom_call.1} parent=31 // pred_check
          %p179 = pneg %p100
        $region34: #{tpu_custom_call.1} parent=31 // pred_check_branch
          %181 = sbr.rel (%p179) target = $region36
        $region35: #{tpu_custom_call.1} parent=31 // pred_region
          %182 = dma.done [#allocation3], 128
        $region36: #{tpu_custom_call.1} parent=31 // pred_fallthru
          _
        %s183 = sadd.s32 %s23, %s22
        %p184 = scmp.lt.s32.totalorder %s183, 1
        %s185 = scalar_select %p184, %s183, 1
        %s186 = smul.addr %s185, 8
        %s187 = scalar_lea.vmem %s0, %s186
        %p188 = pneg %p53
        %p189 = pneg %p50
        %p190 = pneg %p74
        %p191 = pneg %p71
        %p192 = pneg %p100
        %p193 = pneg %p97
        %p194 = pneg %p128
        %p195 = pneg %p125
        %s196 = sand.u32 %s115, 1
        %s197 = scalar_lea.sflag [#allocation4], %s196
        %s198 = sand.u32 %s115, 1
        %s199 = smul.addr %s198, 8
        %s200 = scalar_lea.vmem [#allocation5], %s199
        %s201 = sadd.s32 %s23, %s22
        %p202 = scmp.lt.s32.totalorder %s201, 1
        %s203 = scalar_select %p202, %s201, 1
        %s204 = smul.addr %s203, 8
        %s205 = scalar_lea.vmem %s0, %s204
        %s206 = sadd.s32 %s23, %s22
        %s207 = sadd.s32 %s23, %s22
        %v208 = vld [vmem:[%s205] sm:$0xff]
        %v209 = vlaneseq
        %v210 = vand.u32 %v209, 127
        %211 = vset.pattern.permute.xlu0 0
        %212 = vperm.xlu0 %211, %v208
        %v213 = vpop.permute.xlu0 %212
        %vm214 = vcmp.eq.s32.totalorder %v213, %v210
        %v215 = vsel %vm214, 1, 0
        %v216 = vcvt.s32.f32 %v215
        %v217 = vld [vmem:[%s1] sm:$0xff]
        %v218 = vld [vmem:[%s1 + $0x8] sm:$0xff]
        %v219 = vld [vmem:[#allocation2] sm:$0xff]
        %vm220 = vcmask 130048
        %v222 = vsel %vm220, %v216, 0
        %224 = vmatprep.subr.mxu0 0.0
        %225 = vmatpush1.msra.mxu0 0.0
        %226 = vmatprep.subr.mxu0 0.0
        %227 = vmatpush1.msra.mxu0 0.0
        %228 = vmatprep.subr.mxu0 0.0
        %229 = vmatpush1.msra.mxu0 0.0
        %230 = vmatprep.subr.mxu0 0.0
        %231 = vmatpush1.msra.mxu0 0.0
        %232 = vmatprep.subr.mxu0 0.0
        %233 = vmatpush1.msra.mxu0 0.0
        %234 = vmatprep.subr.mxu0 0.0
        %235 = vmatpush1.msra.mxu0 0.0
        %236 = vmatprep.subr.mxu0 0.0
        %237 = vmatpush1.msra.mxu0 0.0
        %238 = vmatprep.subr.mxu0 0.0
        %239 = vmatpush1.msra.mxu0 0.0
        %240 = vmatprep.subr.mxu0 0.0
        %241 = vmatpush1.msra.mxu0 0.0
        %242 = vmatprep.subr.mxu0 0.0
        %243 = vmatpush1.msra.mxu0 0.0
        %244 = vmatprep.subr.mxu0 0.0
        %245 = vmatpush1.msra.mxu0 0.0
        %246 = vmatprep.subr.mxu0 0.0
        %247 = vmatpush1.msra.mxu0 0.0
        %248 = vmatprep.subr.mxu0 0.0
        %249 = vmatpush1.msra.mxu0 0.0
        %250 = vmatprep.subr.mxu0 0.0
        %251 = vmatpush1.msra.mxu0 0.0
        %252 = vmatprep.subr.mxu0 0.0
        %v253 = vand.u32 %v218, 4294901760
        %254 = vmatpush1.msra.mxu0 %v253
        %255 = vmatprep.subr.mxu0 0.0
        %v256 = vand.u32 %v217, 4294901760
        %257 = vmatpush1.msra.mxu0 %v256
        %258 = vmatprep.subr.mxu0 0.0
        %259 = vmatpush2.msra.mxu0 0.0
        %260 = vmatprep.subr.mxu0 0.0
        %261 = vmatpush2.msra.mxu0 0.0
        %262 = vmatprep.subr.mxu0 0.0
        %263 = vmatpush2.msra.mxu0 0.0
        %264 = vmatprep.subr.mxu0 0.0
        %265 = vmatpush2.msra.mxu0 0.0
        %266 = vmatprep.subr.mxu0 0.0
        %267 = vmatpush2.msra.mxu0 0.0
        %268 = vmatprep.subr.mxu0 0.0
        %269 = vmatpush2.msra.mxu0 0.0
        %270 = vmatprep.subr.mxu0 0.0
        %271 = vmatpush2.msra.mxu0 0.0
        %272 = vmatprep.subr.mxu0 0.0
        %273 = vmatpush2.msra.mxu0 0.0
        %274 = vmatprep.subr.mxu0 0.0
        %275 = vmatpush2.msra.mxu0 0.0
        %276 = vmatprep.subr.mxu0 0.0
        %277 = vmatpush2.msra.mxu0 0.0
        %278 = vmatprep.subr.mxu0 0.0
        %279 = vmatpush2.msra.mxu0 0.0
        %280 = vmatprep.subr.mxu0 0.0
        %281 = vmatpush2.msra.mxu0 0.0
        %282 = vmatprep.subr.mxu0 0.0
        %283 = vmatpush2.msra.mxu0 0.0
        %284 = vmatprep.subr.mxu0 0.0
        %285 = vmatpush2.msra.mxu0 0.0
        %286 = vmatprep.subr.mxu0 0.0
        %287 = vmatpush2.msra.mxu0 0.0
        %288 = vmatprep.subr.mxu0 0.0
        %289 = vmatpush2.msra.mxu0 0.0
        %290 = vmatprep.mubr.f32.mxu0 0.0
        %v291 = vand.u32 %v222, 4294901760
        %v292 = vsub.f32 %v222, %v291
        %v293 = vand.u32 %v292, 4294901760
        %v294 = vsub.f32 %v292, %v293
        %v295 = vand.u32 %v294, 4294901760
        %296 = vmatmul.mubr.f32.gmra.mxu0 %v295
        %v297 = vpop.f32.mrf.mxu0
        %v298 = vadd.f32 %v219, %v297
        %v299 = vpop.f32.mrf.mxu0
        %300 = vdwg.mxu0
        %301 = vmatprep.subr.mxu0 0.0
        %302 = vmatpush1.msra.mxu0 0.0
        %303 = vmatprep.subr.mxu0 0.0
        %304 = vmatpush1.msra.mxu0 0.0
        %305 = vmatprep.subr.mxu0 0.0
        %306 = vmatpush1.msra.mxu0 0.0
        %307 = vmatprep.subr.mxu0 0.0
        %308 = vmatpush1.msra.mxu0 0.0
        %309 = vmatprep.subr.mxu0 0.0
        %310 = vmatpush1.msra.mxu0 0.0
        %311 = vmatprep.subr.mxu0 0.0
        %312 = vmatpush1.msra.mxu0 0.0
        %313 = vmatprep.subr.mxu0 0.0
        %314 = vmatpush1.msra.mxu0 0.0
        %315 = vmatprep.subr.mxu0 0.0
        %316 = vmatpush1.msra.mxu0 0.0
        %317 = vmatprep.subr.mxu0 0.0
        %318 = vmatpush1.msra.mxu0 0.0
        %319 = vmatprep.subr.mxu0 0.0
        %320 = vmatpush1.msra.mxu0 0.0
        %321 = vmatprep.subr.mxu0 0.0
        %322 = vmatpush1.msra.mxu0 0.0
        %323 = vmatprep.subr.mxu0 0.0
        %324 = vmatpush1.msra.mxu0 0.0
        %325 = vmatprep.subr.mxu0 0.0
        %326 = vmatpush1.msra.mxu0 0.0
        %327 = vmatprep.subr.mxu0 0.0
        %328 = vmatpush1.msra.mxu0 0.0
        %329 = vmatprep.subr.mxu0 0.0
        %v330 = vand.u32 %v218, 4294901760
        %v331 = vsub.f32 %v218, %v330
        %v332 = vand.u32 %v331, 4294901760
        %v333 = vsub.f32 %v331, %v332
        %v334 = vand.u32 %v333, 4294901760
        %335 = vmatpush1.msra.mxu0 %v334
        %336 = vmatprep.subr.mxu0 0.0
        %v337 = vand.u32 %v217, 4294901760
        %v338 = vsub.f32 %v217, %v337
        %v339 = vand.u32 %v338, 4294901760
        %v340 = vsub.f32 %v338, %v339
        %v341 = vand.u32 %v340, 4294901760
        %342 = vmatpush1.msra.mxu0 %v341
        %343 = vmatprep.subr.mxu0 0.0
        %344 = vmatpush2.msra.mxu0 0.0
        %345 = vmatprep.subr.mxu0 0.0
        %346 = vmatpush2.msra.mxu0 0.0
        %347 = vmatprep.subr.mxu0 0.0
        %348 = vmatpush2.msra.mxu0 0.0
        %349 = vmatprep.subr.mxu0 0.0
        %350 = vmatpush2.msra.mxu0 0.0
        %351 = vmatprep.subr.mxu0 0.0
        %352 = vmatpush2.msra.mxu0 0.0
        %353 = vmatprep.subr.mxu0 0.0
        %354 = vmatpush2.msra.mxu0 0.0
        %355 = vmatprep.subr.mxu0 0.0
        %356 = vmatpush2.msra.mxu0 0.0
        %357 = vmatprep.subr.mxu0 0.0
        %358 = vmatpush2.msra.mxu0 0.0
        %359 = vmatprep.subr.mxu0 0.0
        %360 = vmatpush2.msra.mxu0 0.0
        %361 = vmatprep.subr.mxu0 0.0
        %362 = vmatpush2.msra.mxu0 0.0
        %363 = vmatprep.subr.mxu0 0.0
        %364 = vmatpush2.msra.mxu0 0.0
        %365 = vmatprep.subr.mxu0 0.0
        %366 = vmatpush2.msra.mxu0 0.0
        %367 = vmatprep.subr.mxu0 0.0
        %368 = vmatpush2.msra.mxu0 0.0
        %369 = vmatprep.subr.mxu0 0.0
        %370 = vmatpush2.msra.mxu0 0.0
        %371 = vmatprep.subr.mxu0 0.0
        %372 = vmatpush2.msra.mxu0 0.0
        %373 = vmatprep.subr.mxu0 0.0
        %374 = vmatpush2.msra.mxu0 0.0
        %375 = vmatprep.mubr.f32.mxu0 0.0
        %v376 = vand.u32 %v222, 4294901760
        %377 = vmatmul.mubr.f32.gmra.mxu0 %v376
        %v378 = vpop.f32.mrf.mxu0
        %v379 = vadd.f32 %v298, %v378
        %v380 = vpop.f32.mrf.mxu0
        %381 = vdwg.mxu0
        %382 = vmatprep.subr.mxu0 0.0
        %383 = vmatpush1.msra.mxu0 0.0
        %384 = vmatprep.subr.mxu0 0.0
        %385 = vmatpush1.msra.mxu0 0.0
        %386 = vmatprep.subr.mxu0 0.0
        %387 = vmatpush1.msra.mxu0 0.0
        %388 = vmatprep.subr.mxu0 0.0
        %389 = vmatpush1.msra.mxu0 0.0
        %390 = vmatprep.subr.mxu0 0.0
        %391 = vmatpush1.msra.mxu0 0.0
        %392 = vmatprep.subr.mxu0 0.0
        %393 = vmatpush1.msra.mxu0 0.0
        %394 = vmatprep.subr.mxu0 0.0
        %395 = vmatpush1.msra.mxu0 0.0
        %396 = vmatprep.subr.mxu0 0.0
        %397 = vmatpush1.msra.mxu0 0.0
        %398 = vmatprep.subr.mxu0 0.0
        %399 = vmatpush1.msra.mxu0 0.0
        %400 = vmatprep.subr.mxu0 0.0
        %401 = vmatpush1.msra.mxu0 0.0
        %402 = vmatprep.subr.mxu0 0.0
        %403 = vmatpush1.msra.mxu0 0.0
        %404 = vmatprep.subr.mxu0 0.0
        %405 = vmatpush1.msra.mxu0 0.0
        %406 = vmatprep.subr.mxu0 0.0
        %407 = vmatpush1.msra.mxu0 0.0
        %408 = vmatprep.subr.mxu0 0.0
        %409 = vmatpush1.msra.mxu0 0.0
        %410 = vmatprep.subr.mxu0 0.0
        %v411 = vand.u32 %v218, 4294901760
        %v412 = vsub.f32 %v218, %v411
        %413 = vmatpush1.msra.mxu0 %v412
        %414 = vmatprep.subr.mxu0 0.0
        %v415 = vand.u32 %v217, 4294901760
        %v416 = vsub.f32 %v217, %v415
        %417 = vmatpush1.msra.mxu0 %v416
        %418 = vmatprep.subr.mxu0 0.0
        %419 = vmatpush2.msra.mxu0 0.0
        %420 = vmatprep.subr.mxu0 0.0
        %421 = vmatpush2.msra.mxu0 0.0
        %422 = vmatprep.subr.mxu0 0.0
        %423 = vmatpush2.msra.mxu0 0.0
        %424 = vmatprep.subr.mxu0 0.0
        %425 = vmatpush2.msra.mxu0 0.0
        %426 = vmatprep.subr.mxu0 0.0
        %427 = vmatpush2.msra.mxu0 0.0
        %428 = vmatprep.subr.mxu0 0.0
        %429 = vmatpush2.msra.mxu0 0.0
        %430 = vmatprep.subr.mxu0 0.0
        %431 = vmatpush2.msra.mxu0 0.0
        %432 = vmatprep.subr.mxu0 0.0
        %433 = vmatpush2.msra.mxu0 0.0
        %434 = vmatprep.subr.mxu0 0.0
        %435 = vmatpush2.msra.mxu0 0.0
        %436 = vmatprep.subr.mxu0 0.0
        %437 = vmatpush2.msra.mxu0 0.0
        %438 = vmatprep.subr.mxu0 0.0
        %439 = vmatpush2.msra.mxu0 0.0
        %440 = vmatprep.subr.mxu0 0.0
        %441 = vmatpush2.msra.mxu0 0.0
        %442 = vmatprep.subr.mxu0 0.0
        %443 = vmatpush2.msra.mxu0 0.0
        %444 = vmatprep.subr.mxu0 0.0
        %445 = vmatpush2.msra.mxu0 0.0
        %446 = vmatprep.subr.mxu0 0.0
        %447 = vmatpush2.msra.mxu0 0.0
        %448 = vmatprep.subr.mxu0 0.0
        %449 = vmatpush2.msra.mxu0 0.0
        %450 = vmatprep.mubr.f32.mxu0 0.0
        %v451 = vand.u32 %v222, 4294901760
        %v452 = vsub.f32 %v222, %v451
        %453 = vmatmul.mubr.f32.gmra.mxu0 %v452
        %v454 = vpop.f32.mrf.mxu0
        %v455 = vadd.f32 %v379, %v454
        %v456 = vpop.f32.mrf.mxu0
        %457 = vdwg.mxu0
        %458 = vmatprep.subr.mxu0 0.0
        %459 = vmatpush1.msra.mxu0 0.0
        %460 = vmatprep.subr.mxu0 0.0
        %461 = vmatpush1.msra.mxu0 0.0
        %462 = vmatprep.subr.mxu0 0.0
        %463 = vmatpush1.msra.mxu0 0.0
        %464 = vmatprep.subr.mxu0 0.0
        %465 = vmatpush1.msra.mxu0 0.0
        %466 = vmatprep.subr.mxu0 0.0
        %467 = vmatpush1.msra.mxu0 0.0
        %468 = vmatprep.subr.mxu0 0.0
        %469 = vmatpush1.msra.mxu0 0.0
        %470 = vmatprep.subr.mxu0 0.0
        %471 = vmatpush1.msra.mxu0 0.0
        %472 = vmatprep.subr.mxu0 0.0
        %473 = vmatpush1.msra.mxu0 0.0
        %474 = vmatprep.subr.mxu0 0.0
        %475 = vmatpush1.msra.mxu0 0.0
        %476 = vmatprep.subr.mxu0 0.0
        %477 = vmatpush1.msra.mxu0 0.0
        %478 = vmatprep.subr.mxu0 0.0
        %479 = vmatpush1.msra.mxu0 0.0
        %480 = vmatprep.subr.mxu0 0.0
        %481 = vmatpush1.msra.mxu0 0.0
        %482 = vmatprep.subr.mxu0 0.0
        %483 = vmatpush1.msra.mxu0 0.0
        %484 = vmatprep.subr.mxu0 0.0
        %485 = vmatpush1.msra.mxu0 0.0
        %486 = vmatprep.subr.mxu0 0.0
        %v487 = vand.u32 %v218, 4294901760
        %488 = vmatpush1.msra.mxu0 %v487
        %489 = vmatprep.subr.mxu0 0.0
        %v490 = vand.u32 %v217, 4294901760
        %491 = vmatpush1.msra.mxu0 %v490
        %492 = vmatprep.subr.mxu0 0.0
        %493 = vmatpush2.msra.mxu0 0.0
        %494 = vmatprep.subr.mxu0 0.0
        %495 = vmatpush2.msra.mxu0 0.0
        %496 = vmatprep.subr.mxu0 0.0
        %497 = vmatpush2.msra.mxu0 0.0
        %498 = vmatprep.subr.mxu0 0.0
        %499 = vmatpush2.msra.mxu0 0.0
        %500 = vmatprep.subr.mxu0 0.0
        %501 = vmatpush2.msra.mxu0 0.0
        %502 = vmatprep.subr.mxu0 0.0
        %503 = vmatpush2.msra.mxu0 0.0
        %504 = vmatprep.subr.mxu0 0.0
        %505 = vmatpush2.msra.mxu0 0.0
        %506 = vmatprep.subr.mxu0 0.0
        %507 = vmatpush2.msra.mxu0 0.0
        %508 = vmatprep.subr.mxu0 0.0
        %509 = vmatpush2.msra.mxu0 0.0
        %510 = vmatprep.subr.mxu0 0.0
        %511 = vmatpush2.msra.mxu0 0.0
        %512 = vmatprep.subr.mxu0 0.0
        %513 = vmatpush2.msra.mxu0 0.0
        %514 = vmatprep.subr.mxu0 0.0
        %515 = vmatpush2.msra.mxu0 0.0
        %516 = vmatprep.subr.mxu0 0.0
        %517 = vmatpush2.msra.mxu0 0.0
        %518 = vmatprep.subr.mxu0 0.0
        %519 = vmatpush2.msra.mxu0 0.0
        %520 = vmatprep.subr.mxu0 0.0
        %521 = vmatpush2.msra.mxu0 0.0
        %522 = vmatprep.subr.mxu0 0.0
        %523 = vmatpush2.msra.mxu0 0.0
        %524 = vmatprep.mubr.f32.mxu0 0.0
        %v525 = vand.u32 %v222, 4294901760
        %v526 = vsub.f32 %v222, %v525
        %v527 = vand.u32 %v526, 4294901760
        %528 = vmatmul.mubr.f32.gmra.mxu0 %v527
        %v529 = vpop.f32.mrf.mxu0
        %v530 = vadd.f32 %v455, %v529
        %v531 = vpop.f32.mrf.mxu0
        %532 = vdwg.mxu0
        %533 = vmatprep.subr.mxu0 0.0
        %534 = vmatpush1.msra.mxu0 0.0
        %535 = vmatprep.subr.mxu0 0.0
        %536 = vmatpush1.msra.mxu0 0.0
        %537 = vmatprep.subr.mxu0 0.0
        %538 = vmatpush1.msra.mxu0 0.0
        %539 = vmatprep.subr.mxu0 0.0
        %540 = vmatpush1.msra.mxu0 0.0
        %541 = vmatprep.subr.mxu0 0.0
        %542 = vmatpush1.msra.mxu0 0.0
        %543 = vmatprep.subr.mxu0 0.0
        %544 = vmatpush1.msra.mxu0 0.0
        %545 = vmatprep.subr.mxu0 0.0
        %546 = vmatpush1.msra.mxu0 0.0
        %547 = vmatprep.subr.mxu0 0.0
        %548 = vmatpush1.msra.mxu0 0.0
        %549 = vmatprep.subr.mxu0 0.0
        %550 = vmatpush1.msra.mxu0 0.0
        %551 = vmatprep.subr.mxu0 0.0
        %552 = vmatpush1.msra.mxu0 0.0
        %553 = vmatprep.subr.mxu0 0.0
        %554 = vmatpush1.msra.mxu0 0.0
        %555 = vmatprep.subr.mxu0 0.0
        %556 = vmatpush1.msra.mxu0 0.0
        %557 = vmatprep.subr.mxu0 0.0
        %558 = vmatpush1.msra.mxu0 0.0
        %559 = vmatprep.subr.mxu0 0.0
        %560 = vmatpush1.msra.mxu0 0.0
        %561 = vmatprep.subr.mxu0 0.0
        %v562 = vand.u32 %v218, 4294901760
        %v563 = vsub.f32 %v218, %v562
        %v564 = vand.u32 %v563, 4294901760
        %565 = vmatpush1.msra.mxu0 %v564
        %566 = vmatprep.subr.mxu0 0.0
        %v567 = vand.u32 %v217, 4294901760
        %v568 = vsub.f32 %v217, %v567
        %v569 = vand.u32 %v568, 4294901760
        %570 = vmatpush1.msra.mxu0 %v569
        %571 = vmatprep.subr.mxu0 0.0
        %572 = vmatpush2.msra.mxu0 0.0
        %573 = vmatprep.subr.mxu0 0.0
        %574 = vmatpush2.msra.mxu0 0.0
        %575 = vmatprep.subr.mxu0 0.0
        %576 = vmatpush2.msra.mxu0 0.0
        %577 = vmatprep.subr.mxu0 0.0
        %578 = vmatpush2.msra.mxu0 0.0
        %579 = vmatprep.subr.mxu0 0.0
        %580 = vmatpush2.msra.mxu0 0.0
        %581 = vmatprep.subr.mxu0 0.0
        %582 = vmatpush2.msra.mxu0 0.0
        %583 = vmatprep.subr.mxu0 0.0
        %584 = vmatpush2.msra.mxu0 0.0
        %585 = vmatprep.subr.mxu0 0.0
        %586 = vmatpush2.msra.mxu0 0.0
        %587 = vmatprep.subr.mxu0 0.0
        %588 = vmatpush2.msra.mxu0 0.0
        %589 = vmatprep.subr.mxu0 0.0
        %590 = vmatpush2.msra.mxu0 0.0
        %591 = vmatprep.subr.mxu0 0.0
        %592 = vmatpush2.msra.mxu0 0.0
        %593 = vmatprep.subr.mxu0 0.0
        %594 = vmatpush2.msra.mxu0 0.0
        %595 = vmatprep.subr.mxu0 0.0
        %596 = vmatpush2.msra.mxu0 0.0
        %597 = vmatprep.subr.mxu0 0.0
        %598 = vmatpush2.msra.mxu0 0.0
        %599 = vmatprep.subr.mxu0 0.0
        %600 = vmatpush2.msra.mxu0 0.0
        %601 = vmatprep.subr.mxu0 0.0
        %602 = vmatpush2.msra.mxu0 0.0
        %603 = vmatprep.mubr.f32.mxu0 0.0
        %v604 = vand.u32 %v222, 4294901760
        %605 = vmatmul.mubr.f32.gmra.mxu0 %v604
        %v606 = vpop.f32.mrf.mxu0
        %v607 = vadd.f32 %v530, %v606
        %v608 = vpop.f32.mrf.mxu0
        %609 = vdwg.mxu0
        %610 = vmatprep.subr.mxu0 0.0
        %611 = vmatpush1.msra.mxu0 0.0
        %612 = vmatprep.subr.mxu0 0.0
        %613 = vmatpush1.msra.mxu0 0.0
        %614 = vmatprep.subr.mxu0 0.0
        %615 = vmatpush1.msra.mxu0 0.0
        %616 = vmatprep.subr.mxu0 0.0
        %617 = vmatpush1.msra.mxu0 0.0
        %618 = vmatprep.subr.mxu0 0.0
        %619 = vmatpush1.msra.mxu0 0.0
        %620 = vmatprep.subr.mxu0 0.0
        %621 = vmatpush1.msra.mxu0 0.0
        %622 = vmatprep.subr.mxu0 0.0
        %623 = vmatpush1.msra.mxu0 0.0
        %624 = vmatprep.subr.mxu0 0.0
        %625 = vmatpush1.msra.mxu0 0.0
        %626 = vmatprep.subr.mxu0 0.0
        %627 = vmatpush1.msra.mxu0 0.0
        %628 = vmatprep.subr.mxu0 0.0
        %629 = vmatpush1.msra.mxu0 0.0
        %630 = vmatprep.subr.mxu0 0.0
        %631 = vmatpush1.msra.mxu0 0.0
        %632 = vmatprep.subr.mxu0 0.0
        %633 = vmatpush1.msra.mxu0 0.0
        %634 = vmatprep.subr.mxu0 0.0
        %635 = vmatpush1.msra.mxu0 0.0
        %636 = vmatprep.subr.mxu0 0.0
        %637 = vmatpush1.msra.mxu0 0.0
        %638 = vmatprep.subr.mxu0 0.0
        %v639 = vand.u32 %v218, 4294901760
        %640 = vmatpush1.msra.mxu0 %v639
        %641 = vmatprep.subr.mxu0 0.0
        %v642 = vand.u32 %v217, 4294901760
        %643 = vmatpush1.msra.mxu0 %v642
        %644 = vmatprep.subr.mxu0 0.0
        %645 = vmatpush2.msra.mxu0 0.0
        %646 = vmatprep.subr.mxu0 0.0
        %647 = vmatpush2.msra.mxu0 0.0
        %648 = vmatprep.subr.mxu0 0.0
        %649 = vmatpush2.msra.mxu0 0.0
        %650 = vmatprep.subr.mxu0 0.0
        %651 = vmatpush2.msra.mxu0 0.0
        %652 = vmatprep.subr.mxu0 0.0
        %653 = vmatpush2.msra.mxu0 0.0
        %654 = vmatprep.subr.mxu0 0.0
        %655 = vmatpush2.msra.mxu0 0.0
        %656 = vmatprep.subr.mxu0 0.0
        %657 = vmatpush2.msra.mxu0 0.0
        %658 = vmatprep.subr.mxu0 0.0
        %659 = vmatpush2.msra.mxu0 0.0
        %660 = vmatprep.subr.mxu0 0.0
        %661 = vmatpush2.msra.mxu0 0.0
        %662 = vmatprep.subr.mxu0 0.0
        %663 = vmatpush2.msra.mxu0 0.0
        %664 = vmatprep.subr.mxu0 0.0
        %665 = vmatpush2.msra.mxu0 0.0
        %666 = vmatprep.subr.mxu0 0.0
        %667 = vmatpush2.msra.mxu0 0.0
        %668 = vmatprep.subr.mxu0 0.0
        %669 = vmatpush2.msra.mxu0 0.0
        %670 = vmatprep.subr.mxu0 0.0
        %671 = vmatpush2.msra.mxu0 0.0
        %672 = vmatprep.subr.mxu0 0.0
        %673 = vmatpush2.msra.mxu0 0.0
        %674 = vmatprep.subr.mxu0 0.0
        %675 = vmatpush2.msra.mxu0 0.0
        %676 = vmatprep.mubr.f32.mxu0 0.0
        %v677 = vand.u32 %v222, 4294901760
        %678 = vmatmul.mubr.f32.gmra.mxu0 %v677
        %v679 = vpop.f32.mrf.mxu0
        %v680 = vadd.f32 %v607, %v679
        %v681 = vpop.f32.mrf.mxu0
        %682 = vdwg.mxu0
        %683 = vst [vmem:[%s200] sm:$0xff] %v680
        %s684 = sand.u32 %s115, 1
        %s685 = scalar_lea.sflag [#allocation4], %s684
        %s686 = sand.u32 %s115, 1
        %s687 = smul.addr %s686, 8
        %s688 = scalar_lea.vmem [#allocation5], %s687
        // Predicated region
        $region37: #{tpu_custom_call.1} parent=31 // pred_check
          %p689 = pneg %p125
        $region38: #{tpu_custom_call.1} parent=31 // pred_check_branch
          %691 = sbr.rel (%p689) target = $region40
        $region39: #{tpu_custom_call.1} parent=31 // pred_region
          %s692 = sadd.s32 %s23, %s22
          %s694 = ssub.s32 128, 128
          %695 = vsyncadd %s685, %s694
          %s696 = smul.addr %s692, 128
          %s697 = scalar_lea.hbm %s3, %s696
          %s699 = sshll.u32 %s688, 4
          %s700 = int_to_ptr.vmem [resolvable:$true] %s699
          %702 = dma.vmem_to_hbm [thread:$0]  %s700, 128, %s697, %s685
        $region40: #{tpu_custom_call.1} parent=31 // pred_fallthru
          _
      $region32: #{tpu_custom_call.1} parent=5 // pred_fallthru
        _
      %p703 = scmp.le.s32.totalorder 2, %s13
      // Predicated region
      $region41: #{tpu_custom_call.1} parent=5 // pred_check
        %p704 = pneg %p703
      $region42: #{tpu_custom_call.1} parent=5 // pred_check_branch
        %706 = sbr.rel (%p704) target = $region44
      $region43: #{tpu_custom_call.1} parent=5 // pred_region
        %s707 = ssub.s32 %s13, 2
        // Predicated region
        $region45: #{tpu_custom_call.1} parent=43 // pred_check
          %p708 = pneg %p131
        $region46: #{tpu_custom_call.1} parent=43 // pred_check_branch
          %710 = sbr.rel (%p708) target = $region48
        $region47: #{tpu_custom_call.1} parent=43 // pred_region
          %s711 = sand.u32 %s116, 1
          %s712 = scalar_lea.sflag [#allocation4], %s711
          %s713 = sand.u32 %s116, 1
          %s714 = smul.addr %s713, 8
          %s715 = scalar_lea.vmem [#allocation5], %s714
          %716 = dma.done %s712, 128
        $region48: #{tpu_custom_call.1} parent=43 // pred_fallthru
          _
      $region44: #{tpu_custom_call.1} parent=5 // pred_fallthru
        _
    $region6: #{tpu_custom_call.1} parent=1 // loop_footer
      %s17 = sadd.s32 1, %s13
    $region7: #{tpu_custom_call.1} parent=1 // loop_footer_branch
      %12 = sbr.rel target = $region3
    $region8: #{tpu_custom_call.1} parent=1 // loop_exit
      _
    %717 = vsyncpa [#allocation3], 1
    %s718 = scalar_lea.sflag [#allocation3], 1
    %719 = vsyncpa %s718, 1
    %720 = vsyncpa [#allocation4], 1
    %s721 = scalar_lea.sflag [#allocation4], 1
    %722 = vsyncpa %s721, 1

</llo_original>
